<compile_context>
chip_gen: v6e
topology: v6e:2x2x1
jax: 0.10.0
libtpu: 0.0.40
codegen_flags: <defaults>
</compile_context>

<pallas_src>
import jax
import jax.numpy as jnp
from jax.experimental import pallas as pl
from jax.experimental.pallas import tpu as pltpu


def _classifier_pair_kernel(f1_ref, f2_ref, w_ref, b_ref, o1_ref, o2_ref):
    # f1_ref, f2_ref: (B, D)  input features (independent BN statistics each)
    # w_ref:          (D, C)  bf16, gamma already folded in, layout (in, out)
    # b_ref:          (1, C)  f32, beta @ W + b already folded in
    # o1_ref, o2_ref: (B, C)  logits

    def batchnorm(x_ref):
        x = x_ref[...]
        if x.dtype != jnp.float32:          # explicit precision choice; no dead cast for f32 inputs
            x = x.astype(jnp.float32)
        mean = jnp.mean(x, axis=0, keepdims=True)            # (1, D)
        diff = x - mean
        var = jnp.mean(diff * diff, axis=0, keepdims=True)   # biased variance
        inv_std = jax.lax.rsqrt(var + 1e-5)
        return diff * inv_std                                 # (B, D) f32

    y1 = batchnorm(f1_ref)
    y2 = batchnorm(f2_ref)

    # One batched MXU matmul: stack to (2B, D), bf16 operands, f32 accumulate.
    y = jnp.concatenate([y1, y2], axis=0).astype(w_ref.dtype)
    logits = jnp.dot(y, w_ref[...], preferred_element_type=jnp.float32)
    logits = logits + b_ref[...]                               # (2B, C) f32

    B = o1_ref.shape[0]
    o1_ref[...] = logits[:B].astype(o1_ref.dtype)
    o2_ref[...] = logits[B:].astype(o2_ref.dtype)


def classifier_net_forward(f1, f2, w_eff, b_eff):
    """ClassifierNet.forward: BN(train) + Linear for f1 and f2, one fused kernel."""
    B, D = f1.shape
    C = w_eff.shape[1]

    # Advisory cost hint: matmul flops + rough BN flops; W is bf16 (2 B/elem).
    flops = 2 * (2 * B) * D * C + 8 * B * D
    bytes_accessed = (
        (f1.size + f2.size) * 4          # activations in
        + w_eff.size * 2                 # bf16 weight
        + b_eff.size * 4                 # bias
        + 2 * B * C * 4                  # logits out
    )

    return pl.pallas_call(
        _classifier_pair_kernel,
        out_shape=(
            jax.ShapeDtypeStruct((B, C), jnp.float32),
            jax.ShapeDtypeStruct((B, C), jnp.float32),
        ),
        grid_spec=pltpu.PrefetchScalarGridSpec(
            num_scalar_prefetch=0,
            grid=(1,),
            in_specs=[
                pl.BlockSpec((B, D), lambda i: (0, 0)),   # f1
                pl.BlockSpec((B, D), lambda i: (0, 0)),   # f2
                pl.BlockSpec((D, C), lambda i: (0, 0)),   # W (bf16, folded)
                pl.BlockSpec((1, C), lambda i: (0, 0)),   # bias (folded)
            ],
            out_specs=(
                pl.BlockSpec((B, C), lambda i: (0, 0)),
                pl.BlockSpec((B, C), lambda i: (0, 0)),
            ),
        ),
        compiler_params=pltpu.CompilerParams(
            dimension_semantics=("arbitrary",),
        ),
        cost_estimate=pl.CostEstimate(
            flops=flops,
            transcendentals=2 * D,        # rsqrt per feature, per input
            bytes_accessed=bytes_accessed,
        ),
    )(f1, f2, w_eff, b_eff)


def init_params(key, embed_dim, num_class):
    """Mirrors the PyTorch init: BN weight=1, bias=0; Linear W~N(0,0.001), b=0."""
    gamma = jnp.ones((1, embed_dim), jnp.float32)
    beta = jnp.zeros((1, embed_dim), jnp.float32)
    w = 0.001 * jax.random.normal(key, (num_class, embed_dim), jnp.float32)
    w_t = jnp.transpose(w)                       # (D, C)
    b = jnp.zeros((1, num_class), jnp.float32)
    return gamma, beta, w_t, b


def fold_bn_into_linear(gamma, beta, w_t, b):
    """((x-m)*inv*gamma + beta) @ W + b == (x-m)*inv @ (gamma^T * W) + (beta @ W + b)."""
    w_eff = (gamma.reshape(-1, 1) * w_t).astype(jnp.bfloat16)   # (D, C) bf16
    b_eff = (beta @ w_t + b).astype(jnp.float32)                # (1, C) f32
    return w_eff, b_eff


if __name__ == "__main__":
    # Small shapes consistent with the module (embed_dim / num_class scaled down).
    batch = 8
    embed_dim = 128
    num_class = 128

    key = jax.random.PRNGKey(0)
    k_w, k_f1, k_f2 = jax.random.split(key, 3)

    gamma, beta, w_t, b = init_params(k_w, embed_dim, num_class)
    w_eff, b_eff = fold_bn_into_linear(gamma, beta, w_t, b)

    f1 = jax.random.normal(k_f1, (batch, embed_dim), jnp.float32)
    f2 = jax.random.normal(k_f2, (batch, embed_dim), jnp.float32)

    logits1, logits2 = classifier_net_forward(f1, f2, w_eff, b_eff)
    jax.block_until_ready((logits1, logits2))

    # Reference in plain JAX with the original (unfolded, f32) parameters.
    def ref(f):
        mean = f.mean(axis=0, keepdims=True)
        var = ((f - mean) ** 2).mean(axis=0, keepdims=True)
        y = (f - mean) / jnp.sqrt(var + 1e-5) * gamma + beta
        return y @ w_t + b

    # bf16 weight/activation rounding adds ~1e-4 absolute noise on ~1e-2 logits.
    assert jnp.allclose(logits1, ref(f1), atol=5e-4, rtol=5e-3)
    assert jnp.allclose(logits2, ref(f2), atol=5e-4, rtol=5e-3)
    assert logits1.shape == (batch, num_class)
    assert logits2.shape == (batch, num_class)

    # TODO(synk): CrossEntropyLoss / calculate_loss is loss-side, not part of forward; not implemented.
    print("KERNEL_OK")
</pallas_src>

<mosaic_0001>
module attributes {stable_mosaic.version = 11 : i64} {
  func.func @_classifier_pair_kernel(%arg0: i32, %arg1: memref<8x128xf32, #tpu.memory_space<vmem>>, %arg2: memref<8x128xf32, #tpu.memory_space<vmem>>, %arg3: memref<128x128xbf16, #tpu.memory_space<vmem>>, %arg4: memref<1x128xf32, #tpu.memory_space<vmem>>, %arg5: memref<8x128xf32, #tpu.memory_space<vmem>>, %arg6: memref<8x128xf32, #tpu.memory_space<vmem>>) attributes {dimension_semantics = [#tpu.dimension_semantics<arbitrary>], iteration_bounds = array<i64: 1>, scalar_prefetch = 0 : i64, scratch_operands = 0 : i64, tpu.core_type = #tpu.core_type<tc>, window_params = [{pipeline_mode = #tpu.pipeline_mode<synchronous>, transform_indices = @transform_0, window_bounds = array<i64: 8, 128>}, {pipeline_mode = #tpu.pipeline_mode<synchronous>, transform_indices = @transform_1, window_bounds = array<i64: 8, 128>}, {pipeline_mode = #tpu.pipeline_mode<synchronous>, transform_indices = @transform_2, window_bounds = array<i64: 128, 128>}, {pipeline_mode = #tpu.pipeline_mode<synchronous>, transform_indices = @transform_3, window_bounds = array<i64: 1, 128>}, {pipeline_mode = #tpu.pipeline_mode<synchronous>, transform_indices = @transform_4, window_bounds = array<i64: 8, 128>}, {pipeline_mode = #tpu.pipeline_mode<synchronous>, transform_indices = @transform_5, window_bounds = array<i64: 8, 128>}]} {
    %c0 = arith.constant 0 : index
    %c0_0 = arith.constant 0 : index
    %0 = vector.load %arg1[%c0, %c0_0] : memref<8x128xf32, #tpu.memory_space<vmem>>, vector<8x128xf32>
    %cst = arith.constant dense<0.000000e+00> : vector<128xf32>
    %1 = vector.multi_reduction <add>, %0, %cst [0] : vector<8x128xf32> to vector<128xf32>
    %2 = vector.shape_cast %1 : vector<128xf32> to vector<1x128xf32>
    %cst_1 = arith.constant 8.000000e+00 : f32
    %3 = vector.broadcast %cst_1 : f32 to vector<1x128xf32>
    %4 = arith.divf %2, %3 : vector<1x128xf32>
    %5 = vector.broadcast %4 : vector<1x128xf32> to vector<8x128xf32>
    %6 = arith.subf %0, %5 : vector<8x128xf32>
    %7 = arith.mulf %6, %6 : vector<8x128xf32>
    %cst_2 = arith.constant dense<0.000000e+00> : vector<128xf32>
    %8 = vector.multi_reduction <add>, %7, %cst_2 [0] : vector<8x128xf32> to vector<128xf32>
    %9 = vector.shape_cast %8 : vector<128xf32> to vector<1x128xf32>
    %cst_3 = arith.constant 8.000000e+00 : f32
    %10 = vector.broadcast %cst_3 : f32 to vector<1x128xf32>
    %11 = arith.divf %9, %10 : vector<1x128xf32>
    %cst_4 = arith.constant 9.99999974E-6 : f32
    %12 = vector.broadcast %cst_4 : f32 to vector<1x128xf32>
    %13 = arith.addf %11, %12 : vector<1x128xf32>
    %14 = math.rsqrt %13 : vector<1x128xf32>
    %15 = vector.broadcast %14 : vector<1x128xf32> to vector<8x128xf32>
    %16 = arith.mulf %6, %15 : vector<8x128xf32>
    %c0_5 = arith.constant 0 : index
    %c0_6 = arith.constant 0 : index
    %17 = vector.load %arg2[%c0_5, %c0_6] : memref<8x128xf32, #tpu.memory_space<vmem>>, vector<8x128xf32>
    %cst_7 = arith.constant dense<0.000000e+00> : vector<128xf32>
    %18 = vector.multi_reduction <add>, %17, %cst_7 [0] : vector<8x128xf32> to vector<128xf32>
    %19 = vector.shape_cast %18 : vector<128xf32> to vector<1x128xf32>
    %cst_8 = arith.constant 8.000000e+00 : f32
    %20 = vector.broadcast %cst_8 : f32 to vector<1x128xf32>
    %21 = arith.divf %19, %20 : vector<1x128xf32>
    %22 = vector.broadcast %21 : vector<1x128xf32> to vector<8x128xf32>
    %23 = arith.subf %17, %22 : vector<8x128xf32>
    %24 = arith.mulf %23, %23 : vector<8x128xf32>
    %cst_9 = arith.constant dense<0.000000e+00> : vector<128xf32>
    %25 = vector.multi_reduction <add>, %24, %cst_9 [0] : vector<8x128xf32> to vector<128xf32>
    %26 = vector.shape_cast %25 : vector<128xf32> to vector<1x128xf32>
    %cst_10 = arith.constant 8.000000e+00 : f32
    %27 = vector.broadcast %cst_10 : f32 to vector<1x128xf32>
    %28 = arith.divf %26, %27 : vector<1x128xf32>
    %cst_11 = arith.constant 9.99999974E-6 : f32
    %29 = vector.broadcast %cst_11 : f32 to vector<1x128xf32>
    %30 = arith.addf %28, %29 : vector<1x128xf32>
    %31 = math.rsqrt %30 : vector<1x128xf32>
    %32 = vector.broadcast %31 : vector<1x128xf32> to vector<8x128xf32>
    %33 = arith.mulf %23, %32 : vector<8x128xf32>
    %34 = tpu.concatenate %16, %33 in 0 : vector<8x128xf32>, vector<8x128xf32> -> vector<16x128xf32>
    %35 = arith.truncf %34 : vector<16x128xf32> to vector<16x128xbf16>
    %c0_12 = arith.constant 0 : index
    %c0_13 = arith.constant 0 : index
    %36 = vector.load %arg3[%c0_12, %c0_13] : memref<128x128xbf16, #tpu.memory_space<vmem>>, vector<128x128xbf16>
    %cst_14 = arith.constant dense<0.000000e+00> : vector<16x128xf32>
    %37 = tpu.matmul %35, %36, %cst_14 {dimension_numbers = #tpu.dot_dimension_numbers<[1], [0], [0], [1], [0, 0, 1, 1], [], []>} : vector<16x128xbf16>, vector<128x128xbf16>, vector<16x128xf32> -> vector<16x128xf32>
    %c0_15 = arith.constant 0 : index
    %c0_16 = arith.constant 0 : index
    %38 = vector.load %arg4[%c0_15, %c0_16] : memref<1x128xf32, #tpu.memory_space<vmem>>, vector<1x128xf32>
    %39 = vector.broadcast %38 : vector<1x128xf32> to vector<16x128xf32>
    %40 = arith.addf %37, %39 : vector<16x128xf32>
    %41 = vector.extract_strided_slice %40 {offsets = [0, 0], sizes = [8, 128], strides = [1, 1]} : vector<16x128xf32> to vector<8x128xf32>
    %c0_17 = arith.constant 0 : index
    %c0_18 = arith.constant 0 : index
    %42 = vector.load %arg5[%c0_17, %c0_18] : memref<8x128xf32, #tpu.memory_space<vmem>>, vector<8x128xf32>
    tpu.vector_store %arg5[%c0_17, %c0_18], %41 {strides = array<i32>} : memref<8x128xf32, #tpu.memory_space<vmem>>, vector<8x128xf32>,
    %43 = vector.extract_strided_slice %40 {offsets = [8, 0], sizes = [8, 128], strides = [1, 1]} : vector<16x128xf32> to vector<8x128xf32>
    %c0_19 = arith.constant 0 : index
    %c0_20 = arith.constant 0 : index
    %44 = vector.load %arg6[%c0_19, %c0_20] : memref<8x128xf32, #tpu.memory_space<vmem>>, vector<8x128xf32>
    tpu.vector_store %arg6[%c0_19, %c0_20], %43 {strides = array<i32>} : memref<8x128xf32, #tpu.memory_space<vmem>>, vector<8x128xf32>,
    return
  }
  func.func @transform_0(%arg0: i32) -> (i32, i32) {
    %c0_i32 = arith.constant 0 : i32
    %c0_i32_0 = arith.constant 0 : i32
    %c0_i32_1 = arith.constant 0 : i32
    return %c0_i32, %c0_i32_0 : i32, i32
  }
  func.func @transform_1(%arg0: i32) -> (i32, i32) {
    %c0_i32 = arith.constant 0 : i32
    %c0_i32_0 = arith.constant 0 : i32
    %c0_i32_1 = arith.constant 0 : i32
    return %c0_i32, %c0_i32_0 : i32, i32
  }
  func.func @transform_2(%arg0: i32) -> (i32, i32) {
    %c0_i32 = arith.constant 0 : i32
    %c0_i32_0 = arith.constant 0 : i32
    %c0_i32_1 = arith.constant 0 : i32
    return %c0_i32, %c0_i32_0 : i32, i32
  }
  func.func @transform_3(%arg0: i32) -> (i32, i32) {
    %c0_i32 = arith.constant 0 : i32
    %c0_i32_0 = arith.constant 0 : i32
    %c0_i32_1 = arith.constant 0 : i32
    return %c0_i32, %c0_i32_0 : i32, i32
  }
  func.func @transform_4(%arg0: i32) -> (i32, i32) {
    %c0_i32 = arith.constant 0 : i32
    %c0_i32_0 = arith.constant 0 : i32
    %c0_i32_1 = arith.constant 0 : i32
    return %c0_i32, %c0_i32_0 : i32, i32
  }
  func.func @transform_5(%arg0: i32) -> (i32, i32) {
    %c0_i32 = arith.constant 0 : i32
    %c0_i32_0 = arith.constant 0 : i32
    %c0_i32_1 = arith.constant 0 : i32
    return %c0_i32, %c0_i32_0 : i32, i32
  }
}

</mosaic_0001>

<llo_original>
// kernel: tpu_custom_call.1
$region0: #{tpu_custom_call.1}
  #allocation0 [shape = 'u32[]', space=smem, size = 0x4, offset = 0x4, fixed_abs, tag = 'smem constant byte address 0x4 - core index']
  #allocation1 [shape = 'u32[144,128]{1,0:T(1,128)}', space=vmem, size = 0x12000, scoped, tag = 'internal scratch']
  %s0 = inlined_call_operand.hbm [shape: f32[8,128], index: 0, kind: input, shape index: {}]
  %s1 = inlined_call_operand.hbm [shape: f32[8,128], index: 1, kind: input, shape index: {}]
  %s2 = inlined_call_operand.hbm [shape: bf16[128,128], index: 2, kind: input, shape index: {}]
  %s3 = inlined_call_operand.vmem [shape: f32[1,128], index: 3, kind: input, shape index: {}]
  %s4 = inlined_call_operand.hbm [shape: f32[8,128], index: 4, kind: output, shape index: {0}]
  %s5 = inlined_call_operand.hbm [shape: f32[8,128], index: 5, kind: output, shape index: {1}]
  %6 = xla_tuple %s4, %s5
  %s7 = sld [smem:[#allocation0]]
  $region46: #{tpu_custom_call.1} parent=0
    _
  %s9 = ssub.s32 1, %s7
  %s10 = scalar_select 0, %s9, %s7
  $region1: #{tpu_custom_call.1} parent=0
    #allocation2 [shape = 'u8[4096]{0}', space=vmem, size = 0x1000, scoped, tag = 'input window, operand 0, single buffered']
    #allocation3 [shape = 's32[1]{0}', space=sflag, size = 0x4, scoped, tag = 'scoped memory for tpu_custom_call.1']
    #allocation4 [shape = 's32[1]{0}', space=sflag, size = 0x4, scoped, tag = 'scoped memory for tpu_custom_call.1']
    #allocation5 [shape = 'u8[4096]{0}', space=vmem, size = 0x1000, scoped, tag = 'input window, operand 1, single buffered']
    #allocation6 [shape = 's32[1]{0}', space=sflag, size = 0x4, scoped, tag = 'scoped memory for tpu_custom_call.1']
    #allocation7 [shape = 'u8[32768]{0}', space=vmem, size = 0x8000, scoped, tag = 'input window, operand 2, single buffered']
    #allocation8 [shape = 'u8[4096]{0}', space=vmem, size = 0x1000, scoped, tag = 'output window, operand 0, single buffered']
    #allocation9 [shape = 'u8[4096]{0}', space=vmem, size = 0x1000, scoped, tag = 'output window, operand 1, single buffered']
    #allocation10 [shape = 's32[1]{0}', space=sflag, size = 0x4, scoped, tag = 'scoped memory for tpu_custom_call.1']
    %11 = vsyncpa [#allocation3], 0
    %12 = vsyncpa [#allocation6], 0
    %13 = vsyncpa [#allocation4], 0
    %14 = vsyncpa [#allocation10], 0
    // Predicated region
    $region2: #{tpu_custom_call.1} parent=1 // pred_check
      _
    $region3: #{tpu_custom_call.1} parent=1 // pred_check_branch
      %16 = sbr.rel (0) target = $region5
    $region4: #{tpu_custom_call.1} parent=1 // pred_region
      %s18 = ssub.s32 128, 128
      %19 = vsyncadd [#allocation3], %s18
      %s21 = sshll.u32 [#allocation2], 4
      %s22 = int_to_ptr.vmem [resolvable:$true] %s21
      %24 = dma.hbm_to_vmem [thread:$0]  %s0, 128, %s22, [#allocation3]
    $region5: #{tpu_custom_call.1} parent=1 // pred_fallthru
      _
    // Predicated region
    $region6: #{tpu_custom_call.1} parent=1 // pred_check
      _
    $region7: #{tpu_custom_call.1} parent=1 // pred_check_branch
      %26 = sbr.rel (0) target = $region9
    $region8: #{tpu_custom_call.1} parent=1 // pred_region
      %s28 = ssub.s32 128, 128
      %29 = vsyncadd [#allocation6], %s28
      %s31 = sshll.u32 [#allocation5], 4
      %s32 = int_to_ptr.vmem [resolvable:$true] %s31
      %34 = dma.hbm_to_vmem [thread:$0]  %s1, 128, %s32, [#allocation6]
    $region9: #{tpu_custom_call.1} parent=1 // pred_fallthru
      _
    // Predicated region
    $region10: #{tpu_custom_call.1} parent=1 // pred_check
      _
    $region11: #{tpu_custom_call.1} parent=1 // pred_check_branch
      %36 = sbr.rel (0) target = $region13
    $region12: #{tpu_custom_call.1} parent=1 // pred_region
      %s38 = ssub.s32 1024, 1024
      %39 = vsyncadd [#allocation6], %s38
      %s40 = sshll.u32 [#allocation7], 4
      %s41 = int_to_ptr.vmem [resolvable:$true] %s40
      %46 = dma.hbm_to_vmem [thread:$0]  %s2, 1024, %s41, [#allocation6], 64, 64, 4
    $region13: #{tpu_custom_call.1} parent=1 // pred_fallthru
      _
    // Predicated region
    $region14: #{tpu_custom_call.1} parent=1 // pred_check
      _
    $region15: #{tpu_custom_call.1} parent=1 // pred_check_branch
      %48 = sbr.rel (0) target = $region17
    $region16: #{tpu_custom_call.1} parent=1 // pred_region
      _
    $region17: #{tpu_custom_call.1} parent=1 // pred_fallthru
      _
    // Predicated region
    $region18: #{tpu_custom_call.1} parent=1 // pred_check
      _
    $region19: #{tpu_custom_call.1} parent=1 // pred_check_branch
      %50 = sbr.rel (0) target = $region21
    $region20: #{tpu_custom_call.1} parent=1 // pred_region
      %51 = dma.done [#allocation3], 128
    $region21: #{tpu_custom_call.1} parent=1 // pred_fallthru
      _
    // Predicated region
    $region22: #{tpu_custom_call.1} parent=1 // pred_check
      _
    $region23: #{tpu_custom_call.1} parent=1 // pred_check_branch
      %53 = sbr.rel (0) target = $region25
    $region24: #{tpu_custom_call.1} parent=1 // pred_region
      %54 = dma.done [#allocation6], 128
    $region25: #{tpu_custom_call.1} parent=1 // pred_fallthru
      _
    // Predicated region
    $region26: #{tpu_custom_call.1} parent=1 // pred_check
      _
    $region27: #{tpu_custom_call.1} parent=1 // pred_check_branch
      %56 = sbr.rel (0) target = $region29
    $region28: #{tpu_custom_call.1} parent=1 // pred_region
      %57 = dma.done [#allocation6], 1024
    $region29: #{tpu_custom_call.1} parent=1 // pred_fallthru
      _
    %v59 = vld [vmem:[#allocation2] sm:$0xff]
    %v60 = vrot.slane %v59, 4
    %v61 = vadd.f32 %v59, %v60
    %v62 = vrot.slane %v61, 2
    %v63 = vadd.f32 %v61, %v62
    %v64 = vrot.slane %v63, 1
    %v65 = vadd.f32 %v63, %v64
    %v66 = vrcp.pop 8.0
    %v67 = vmul.f32 %v65, %v66
    %v68 = vsub.f32 %v59, %v67
    %v69 = vmul.f32 %v68, %v68
    %v70 = vrot.slane %v69, 4
    %v71 = vadd.f32 %v69, %v70
    %v72 = vrot.slane %v71, 2
    %v73 = vadd.f32 %v71, %v72
    %v74 = vrot.slane %v73, 1
    %v75 = vadd.f32 %v73, %v74
    %v76 = vmul.f32 %v75, %v66
    %v77 = vadd.f32 %v76, 1e-05
    %v78 = vrsqrt.pop %v77
    %v79 = vmul.f32 %v68, %v78
    %v80 = vld [vmem:[#allocation5] sm:$0xff]
    %v81 = vrot.slane %v80, 4
    %v82 = vadd.f32 %v80, %v81
    %v83 = vrot.slane %v82, 2
    %v84 = vadd.f32 %v82, %v83
    %v85 = vrot.slane %v84, 1
    %v86 = vadd.f32 %v84, %v85
    %v87 = vmul.f32 %v86, %v66
    %v88 = vsub.f32 %v80, %v87
    %v89 = vmul.f32 %v88, %v88
    %v90 = vrot.slane %v89, 4
    %v91 = vadd.f32 %v89, %v90
    %v92 = vrot.slane %v91, 2
    %v93 = vadd.f32 %v91, %v92
    %v94 = vrot.slane %v93, 1
    %v95 = vadd.f32 %v93, %v94
    %v96 = vmul.f32 %v95, %v66
    %v97 = vadd.f32 %v96, 1e-05
    %v98 = vrsqrt.pop %v97
    %v99 = vmul.f32 %v88, %v98
    %v100 = vpack.c.bf16 %v99, %v79
    %v101 = vld [vmem:[#allocation7] sm:$0xf]
    %v102 = vld [vmem:[#allocation7 + $0x4] sm:$0xf]
    %v103 = vld [vmem:[#allocation7 + $0x8] sm:$0xf]
    %v104 = vld [vmem:[#allocation7 + $0xc] sm:$0xf]
    %v105 = vld [vmem:[#allocation7 + $0x10] sm:$0xf]
    %v106 = vld [vmem:[#allocation7 + $0x14] sm:$0xf]
    %v107 = vld [vmem:[#allocation7 + $0x18] sm:$0xf]
    %v108 = vld [vmem:[#allocation7 + $0x1c] sm:$0xf]
    %v109 = vld [vmem:[#allocation7 + $0x20] sm:$0xf]
    %v110 = vld [vmem:[#allocation7 + $0x24] sm:$0xf]
    %v111 = vld [vmem:[#allocation7 + $0x28] sm:$0xf]
    %v112 = vld [vmem:[#allocation7 + $0x2c] sm:$0xf]
    %v113 = vld [vmem:[#allocation7 + $0x30] sm:$0xf]
    %v114 = vld [vmem:[#allocation7 + $0x34] sm:$0xf]
    %v115 = vld [vmem:[#allocation7 + $0x38] sm:$0xf]
    %v116 = vld [vmem:[#allocation7 + $0x3c] sm:$0xf]
    %v117 = vld [vmem:[%s3] sm:$0x1]
    %v119 = vlaneseq
    %v120 = vshrl.u32 %v119, 7
    %v121 = vsub.s32 0, %v120
    %v122 = vrot.slane %v117, %v121
    %v140 = vunpack.c.l.b16 %v101
    %v141 = vunpack.c.l.b16 %v102
    %v142 = vunpack.c.l.b16 %v103
    %v143 = vunpack.c.l.b16 %v104
    %v144 = vunpack.c.l.b16 %v105
    %v145 = vunpack.c.l.b16 %v106
    %v146 = vunpack.c.l.b16 %v107
    %v147 = vunpack.c.l.b16 %v108
    %v148 = vunpack.c.l.b16 %v109
    %v149 = vunpack.c.l.b16 %v110
    %v150 = vunpack.c.l.b16 %v111
    %v151 = vunpack.c.l.b16 %v112
    %v152 = vunpack.c.l.b16 %v113
    %v153 = vunpack.c.l.b16 %v114
    %v154 = vunpack.c.l.b16 %v115
    %v155 = vunpack.c.l.b16 %v116
    %v156 = vpack.c.b16 %v141, %v140
    %v157 = vpack.c.b16 %v143, %v142
    %v158 = vpack.c.b16 %v145, %v144
    %v159 = vpack.c.b16 %v147, %v146
    %v160 = vpack.c.b16 %v149, %v148
    %v161 = vpack.c.b16 %v151, %v150
    %v162 = vpack.c.b16 %v153, %v152
    %v163 = vpack.c.b16 %v155, %v154
    %172 = vmatprep.subr.bf16.mxu0 0
    %173 = vmatpush1.bf16.msra.mxu0 %v163
    %174 = vmatprep.subr.bf16.mxu0 0
    %175 = vmatpush1.bf16.msra.mxu0 %v162
    %176 = vmatprep.subr.bf16.mxu0 0
    %177 = vmatpush1.bf16.msra.mxu0 %v161
    %178 = vmatprep.subr.bf16.mxu0 0
    %179 = vmatpush1.bf16.msra.mxu0 %v160
    %180 = vmatprep.subr.bf16.mxu0 0
    %181 = vmatpush1.bf16.msra.mxu0 %v159
    %182 = vmatprep.subr.bf16.mxu0 0
    %183 = vmatpush1.bf16.msra.mxu0 %v158
    %184 = vmatprep.subr.bf16.mxu0 0
    %185 = vmatpush1.bf16.msra.mxu0 %v157
    %186 = vmatprep.subr.bf16.mxu0 0
    %187 = vmatpush1.bf16.msra.mxu0 %v156
    %188 = vmatprep.subr.bf16.mxu0 0
    %189 = vmatpush2.bf16.msra.mxu0 0
    %190 = vmatprep.subr.bf16.mxu0 0
    %191 = vmatpush2.bf16.msra.mxu0 0
    %192 = vmatprep.subr.bf16.mxu0 0
    %193 = vmatpush2.bf16.msra.mxu0 0
    %194 = vmatprep.subr.bf16.mxu0 0
    %195 = vmatpush2.bf16.msra.mxu0 0
    %196 = vmatprep.subr.bf16.mxu0 0
    %197 = vmatpush2.bf16.msra.mxu0 0
    %198 = vmatprep.subr.bf16.mxu0 0
    %199 = vmatpush2.bf16.msra.mxu0 0
    %200 = vmatprep.subr.bf16.mxu0 0
    %201 = vmatpush2.bf16.msra.mxu0 0
    %202 = vmatprep.subr.bf16.mxu0 0
    %203 = vmatpush2.bf16.msra.mxu0 0
    %204 = vmatprep.mubr.bf16.mxu0 0
    %205 = vmatmul.mubr.bf16.gmra.mxu0 %v100
    %v206 = vpop.f32.mrf.mxu0
    %v207 = vadd.f32 %v122, %v206
    %v208 = vpop.f32.mrf.mxu0
    %v209 = vpop.f32.mrf.mxu0
    %v210 = vadd.f32 %v122, %v209
    %v211 = vpop.f32.mrf.mxu0
    %212 = vdwg.mxu0
    %213 = vst [vmem:[#allocation8] sm:$0xff] %v207
    %214 = vst [vmem:[#allocation9] sm:$0xff] %v210
    // Predicated region
    $region30: #{tpu_custom_call.1} parent=1 // pred_check
      _
    $region31: #{tpu_custom_call.1} parent=1 // pred_check_branch
      %216 = sbr.rel (0) target = $region33
    $region32: #{tpu_custom_call.1} parent=1 // pred_region
      %s218 = ssub.s32 128, 128
      %219 = vsyncadd [#allocation4], %s218
      %s221 = sshll.u32 [#allocation8], 4
      %s222 = int_to_ptr.vmem [resolvable:$true] %s221
      %224 = dma.vmem_to_hbm [thread:$0]  %s222, 128, %s4, [#allocation4]
    $region33: #{tpu_custom_call.1} parent=1 // pred_fallthru
      _
    // Predicated region
    $region34: #{tpu_custom_call.1} parent=1 // pred_check
      _
    $region35: #{tpu_custom_call.1} parent=1 // pred_check_branch
      %226 = sbr.rel (0) target = $region37
    $region36: #{tpu_custom_call.1} parent=1 // pred_region
      %s228 = ssub.s32 128, 128
      %229 = vsyncadd [#allocation10], %s228
      %s231 = sshll.u32 [#allocation9], 4
      %s232 = int_to_ptr.vmem [resolvable:$true] %s231
      %234 = dma.vmem_to_hbm [thread:$0]  %s232, 128, %s5, [#allocation10]
    $region37: #{tpu_custom_call.1} parent=1 // pred_fallthru
      _
    // Predicated region
    $region38: #{tpu_custom_call.1} parent=1 // pred_check
      _
    $region39: #{tpu_custom_call.1} parent=1 // pred_check_branch
      %236 = sbr.rel (0) target = $region41
    $region40: #{tpu_custom_call.1} parent=1 // pred_region
      %237 = dma.done [#allocation4], 128
    $region41: #{tpu_custom_call.1} parent=1 // pred_fallthru
      _
    // Predicated region
    $region42: #{tpu_custom_call.1} parent=1 // pred_check
      _
    $region43: #{tpu_custom_call.1} parent=1 // pred_check_branch
      %239 = sbr.rel (0) target = $region45
    $region44: #{tpu_custom_call.1} parent=1 // pred_region
      %240 = dma.done [#allocation10], 128
    $region45: #{tpu_custom_call.1} parent=1 // pred_fallthru
      _
    %241 = vsyncpa [#allocation3], 1
    %242 = vsyncpa [#allocation6], 1
    %243 = vsyncpa [#allocation4], 1
    %244 = vsyncpa [#allocation10], 1

</llo_original>
